<compile_context>
chip_gen: v6e
topology: v6e:2x2x1
jax: 0.10.0
libtpu: 0.0.40
codegen_flags: <defaults>
</compile_context>

<pallas_src>
import jax
import jax.numpy as jnp
import numpy as np
from jax.experimental import pallas as pl
from jax.experimental.pallas import tpu as pltpu

FEATURE_DIM = 32                       # F
NUM_HEADS = 4                          # H  (the attention axis of this module)
HEAD_DIM = FEATURE_DIM // NUM_HEADS    # Dh = 8
HF = NUM_HEADS * FEATURE_DIM           # 128: width of each fused projection chunk
LANE = 128                             # padded input / output lane width
BIAS_LANE = FEATURE_DIM                # lane of x_pad carrying a constant 1.0
NEG_BIG = -1.0e30                      # "minus infinity" for unused score lanes
BATCH = 2


def mhsa_kernel(x_ref, w1_ref, pool_ref, bd_ref, wo_ref, bo_ref, neg_ref, o_ref):
    """Fused MHSA forward on one (TM, 128) row tile; everything stays 2-D, lane-dense."""
    x = x_ref[...]                                            # (TM, 128), lane 32 == 1.0

    # Fused projection (biases folded via the bias lane):
    #   proj = [ scaled-Q tiled x4 | K head-rolled s=0..3 | V head-rolled s=0..3 ]
    proj = jnp.dot(x, w1_ref[...], preferred_element_type=jnp.float32)   # (TM, 384)
    q_rep = proj[:, 0:HF]                 # (TM, 128)
    k_all = proj[:, HF:2 * HF]            # (TM, 128)
    v_all = proj[:, 2 * HF:3 * HF]        # (TM, 128)

    # prod[:, s*F + 8h + d] = q_scaled[b,h,d] * k[b,(h+s)%H,d]
    prod = q_rep * k_all

    # ONE selector matmul packs all H*H scores: lane s*H + h == scores[b, h, (h+s)%H].
    # neg_ref puts -1e30 on the 112 unused lanes so they never win the max below.
    sc = jnp.dot(prod, pool_ref[...], preferred_element_type=jnp.float32) + neg_ref[...]

    # Per-head (group of H, stride-H lanes) max via symmetric XLU rolls — all four
    # lanes of a head group end up with the identical true group max.
    t = jnp.maximum(sc, pltpu.roll(sc, 2 * NUM_HEADS, axis=1))
    t = jnp.maximum(t, pltpu.roll(sc, LANE - 2 * NUM_HEADS, axis=1))
    m = jnp.maximum(t, pltpu.roll(t, NUM_HEADS, axis=1))
    m = jnp.maximum(m, pltpu.roll(t, LANE - NUM_HEADS, axis=1))
    e = jnp.exp(sc - m)        # softmax numerators at lanes 0..15; values on the other
                               # lanes are finite and harmless (rows >=16 of bd are 0).

    # ONE matmul broadcasts numerators AND per-head denominators onto the 128 V lanes.
    nd = jnp.dot(e, bd_ref[...], preferred_element_type=jnp.float32)     # (TM, 256)
    num = nd[:, 0:HF]
    den = nd[:, HF:2 * HF]     # >= 1 everywhere (each head group contains its exp(0))
    attended = num * pl.reciprocal(den, approx=False) * v_all

    # Output projection; the sum over the H chunks is folded into the row-tiled weight.
    o_ref[...] = (jnp.dot(attended, wo_ref[...], preferred_element_type=jnp.float32)
                  + bo_ref[...])                              # lane-dense (TM, 128) store


def prepare_params(params):
    """One-time host-side prep: fuse / permute / zero-pad the PyTorch-layout weights."""
    F, H, DH = FEATURE_DIM, NUM_HEADS, HEAD_DIM
    inv_scale = np.float32(1.0 / np.sqrt(DH))

    wq = np.asarray(params['wq'], np.float32).T * inv_scale   # (in, out); scale folded
    wk = np.asarray(params['wk'], np.float32).T
    wv = np.asarray(params['wv'], np.float32).T
    wo = np.asarray(params['wo'], np.float32).T
    bq = np.asarray(params['bq'], np.float32) * inv_scale
    bk = np.asarray(params['bk'], np.float32)
    bv = np.asarray(params['bv'], np.float32)
    bo = np.asarray(params['bo'], np.float32)

    # head-roll column permutations: chunk s holds k/v of head (h+s)%H at head-h lanes
    perms = [(np.arange(F) + DH * s) % F for s in range(H)]

    w1 = np.concatenate([np.concatenate([wq] * H, axis=1)]
                        + [wk[:, p] for p in perms]
                        + [wv[:, p] for p in perms], axis=1)            # (F, 384)
    b1 = np.concatenate([np.tile(bq, H)]
                        + [bk[p] for p in perms]
                        + [bv[p] for p in perms])                       # (384,)

    # pad contraction axis to 128 lanes; bias row activated by x_pad[:, BIAS_LANE]==1
    w1_pad = np.zeros((LANE, 3 * HF), np.float32)
    w1_pad[:F, :] = w1
    w1_pad[BIAS_LANE, :] = b1

    # pool  : prod lane (s*F + 8h + d)      -> packed score lane (s*H + h)
    # bd    : packed score lane (s*H + h)   -> [numerator | denominator] V lanes
    pool = np.zeros((HF, LANE), np.float32)
    bd = np.zeros((LANE, 2 * HF), np.float32)
    dh = np.arange(DH)
    for s in range(H):
        for h in range(H):
            src = s * F + DH * h + dh          # prod / V lanes of (chunk s, head h)
            band = s * H + h                   # packed lane for scores[b, h, (h+s)%H]
            pool[src, band] = 1.0
            bd[band, src] = 1.0                # numerator broadcast to chunk s, head h
            for c in range(H):                 # denominator broadcast to every chunk
                bd[band, HF + c * F + DH * h + dh] = 1.0

    # output projection, tiled over the H chunks (folds the chunk-sum), lane-padded out
    wo_tiled = np.zeros((HF, LANE), np.float32)
    wo_tiled[:, :F] = np.concatenate([wo] * H, axis=0)
    bo_pad = np.zeros((1, LANE), np.float32)
    bo_pad[0, :F] = bo

    # -1e30 on unused score lanes, 0 on the H*H real ones
    neg = np.full((1, LANE), NEG_BIG, np.float32)
    neg[0, :H * H] = 0.0

    return tuple(jnp.asarray(a) for a in (w1_pad, pool, bd, wo_tiled, bo_pad, neg))


def _round_up(n, m):
    return ((n + m - 1) // m) * m


@jax.jit
def mhsa_forward(x, prep):
    """x: (B, FEATURE_DIM) float32.  prep: output of prepare_params()."""
    w1, pool, bd, wo, bo, neg = prep
    B, F = x.shape

    pb8 = _round_up(B, 8)
    tm = pb8 if pb8 <= 256 else 256        # small/medium B: single row tile; large B:
    pb = _round_up(pb8, tm)                # 256-row tiles (>=2 parallel steps on v7x)

    x_pad = jnp.zeros((pb, LANE), x.dtype)
    x_pad = x_pad.at[:B, :F].set(x)
    x_pad = x_pad.at[:, BIAS_LANE].set(1.0)     # constant bias lane

    out = pl.pallas_call(
        mhsa_kernel,
        out_shape=jax.ShapeDtypeStruct((pb, LANE), jnp.float32),
        grid_spec=pltpu.PrefetchScalarGridSpec(
            num_scalar_prefetch=0,
            grid=(pb // tm,),
            in_specs=[
                pl.BlockSpec((tm, LANE), lambda i: (i, 0)),          # x rows
                pl.BlockSpec((LANE, 3 * HF), lambda i: (0, 0)),      # fused W (+bias row)
                pl.BlockSpec((HF, LANE), lambda i: (0, 0)),          # score-packing pool
                pl.BlockSpec((LANE, 2 * HF), lambda i: (0, 0)),      # [num | den] bcast
                pl.BlockSpec((HF, LANE), lambda i: (0, 0)),          # Wo tiled
                pl.BlockSpec((1, LANE), lambda i: (0, 0)),           # bo
                pl.BlockSpec((1, LANE), lambda i: (0, 0)),           # -1e30 lane mask
            ],
            out_specs=pl.BlockSpec((tm, LANE), lambda i: (i, 0)),
        ),
        compiler_params=pltpu.CompilerParams(dimension_semantics=("parallel",)),
    )(x_pad, w1, pool, bd, wo, bo, neg)

    return out[:B, :F]


def reference(x, params):
    """Pure-JAX reference matching the PyTorch forward exactly."""
    b, f = x.shape
    q = (x @ params['wq'].T + params['bq']).reshape(b, NUM_HEADS, HEAD_DIM)
    k = (x @ params['wk'].T + params['bk']).reshape(b, NUM_HEADS, HEAD_DIM)
    v = (x @ params['wv'].T + params['bv']).reshape(b, NUM_HEADS, HEAD_DIM)
    scores = jnp.einsum('bhd,bgd->bhg', q, k) / np.sqrt(HEAD_DIM)
    attn = jax.nn.softmax(scores, axis=-1)
    att = jnp.einsum('bhg,bgd->bhd', attn, v).reshape(b, f)
    return att @ params['wo'].T + params['bo']


def init_params(key, feature_dim):
    """Deterministic init mimicking nn.Linear default U(-1/sqrt(in), 1/sqrt(in))."""
    bound = 1.0 / np.sqrt(feature_dim)
    names = ['wq', 'bq', 'wk', 'bk', 'wv', 'bv', 'wo', 'bo']
    keys = jax.random.split(key, len(names))
    params = {}
    for name, k in zip(names, keys):
        shape = (feature_dim, feature_dim) if name.startswith('w') else (feature_dim,)
        params[name] = jax.random.uniform(k, shape, jnp.float32, -bound, bound)
    return params


if __name__ == "__main__":
    key = jax.random.PRNGKey(0)
    kx, kp = jax.random.split(key)
    params = init_params(kp, FEATURE_DIM)
    prep = prepare_params(params)        # one-time weight fusion / padding

    # Native shape implied by the module: (batch=2, feature_dim=32) -> one 8-row tile.
    x = jax.random.normal(kx, (BATCH, FEATURE_DIM), jnp.float32)
    out = jax.block_until_ready(mhsa_forward(x, prep))
    ref = jax.block_until_ready(reference(x, params))
    np.testing.assert_allclose(np.asarray(out), np.asarray(ref), rtol=1e-4, atol=1e-5)

    # Medium batch: single 24-row tile (no multi-step overhead for B=20).
    x_mid = jax.random.normal(kx, (20, FEATURE_DIM), jnp.float32)
    out_mid = jax.block_until_ready(mhsa_forward(x_mid, prep))
    ref_mid = jax.block_until_ready(reference(x_mid, params))
    np.testing.assert_allclose(np.asarray(out_mid), np.asarray(ref_mid),
                               rtol=1e-4, atol=1e-5)

    # Large batch: 256-row tiles, 2 "parallel" grid steps (exercises padded rows too).
    x_big = jax.random.normal(kx, (300, FEATURE_DIM), jnp.float32)
    out_big = jax.block_until_ready(mhsa_forward(x_big, prep))
    ref_big = jax.block_until_ready(reference(x_big, params))
    np.testing.assert_allclose(np.asarray(out_big), np.asarray(ref_big),
                               rtol=1e-4, atol=1e-5)

    print("KERNEL_OK")
</pallas_src>

<mosaic_0001>
module attributes {stable_mosaic.version = 11 : i64} {
  func.func @mhsa_kernel(%arg0: i32, %arg1: memref<8x128xf32, #tpu.memory_space<vmem>>, %arg2: memref<128x384xf32, #tpu.memory_space<vmem>>, %arg3: memref<128x128xf32, #tpu.memory_space<vmem>>, %arg4: memref<128x256xf32, #tpu.memory_space<vmem>>, %arg5: memref<128x128xf32, #tpu.memory_space<vmem>>, %arg6: memref<1x128xf32, #tpu.memory_space<vmem>>, %arg7: memref<1x128xf32, #tpu.memory_space<vmem>>, %arg8: memref<8x128xf32, #tpu.memory_space<vmem>>) attributes {dimension_semantics = [#tpu.dimension_semantics<parallel>], iteration_bounds = array<i64: 1>, scalar_prefetch = 0 : i64, scratch_operands = 0 : i64, tpu.core_type = #tpu.core_type<tc>, window_params = [{transform_indices = @transform_0, window_bounds = array<i64: 8, 128>}, {pipeline_mode = #tpu.pipeline_mode<synchronous>, transform_indices = @transform_1, window_bounds = array<i64: 128, 384>}, {pipeline_mode = #tpu.pipeline_mode<synchronous>, transform_indices = @transform_2, window_bounds = array<i64: 128, 128>}, {pipeline_mode = #tpu.pipeline_mode<synchronous>, transform_indices = @transform_3, window_bounds = array<i64: 128, 256>}, {pipeline_mode = #tpu.pipeline_mode<synchronous>, transform_indices = @transform_4, window_bounds = array<i64: 128, 128>}, {pipeline_mode = #tpu.pipeline_mode<synchronous>, transform_indices = @transform_5, window_bounds = array<i64: 1, 128>}, {pipeline_mode = #tpu.pipeline_mode<synchronous>, transform_indices = @transform_6, window_bounds = array<i64: 1, 128>}, {transform_indices = @transform_7, window_bounds = array<i64: 8, 128>}]} {
    %c0 = arith.constant 0 : index
    %c0_0 = arith.constant 0 : index
    %0 = vector.load %arg1[%c0, %c0_0] : memref<8x128xf32, #tpu.memory_space<vmem>>, vector<8x128xf32>
    %c0_1 = arith.constant 0 : index
    %c0_2 = arith.constant 0 : index
    %1 = vector.load %arg2[%c0_1, %c0_2] : memref<128x384xf32, #tpu.memory_space<vmem>>, vector<128x384xf32>
    %cst = arith.constant dense<0.000000e+00> : vector<8x384xf32>
    %2 = tpu.matmul %0, %1, %cst {dimension_numbers = #tpu.dot_dimension_numbers<[1], [0], [0], [1], [0, 0, 1, 1], [], []>} : vector<8x128xf32>, vector<128x384xf32>, vector<8x384xf32> -> vector<8x384xf32>
    %3 = vector.extract_strided_slice %2 {offsets = [0, 0], sizes = [8, 128], strides = [1, 1]} : vector<8x384xf32> to vector<8x128xf32>
    %4 = vector.extract_strided_slice %2 {offsets = [0, 128], sizes = [8, 128], strides = [1, 1]} : vector<8x384xf32> to vector<8x128xf32>
    %5 = vector.extract_strided_slice %2 {offsets = [0, 256], sizes = [8, 128], strides = [1, 1]} : vector<8x384xf32> to vector<8x128xf32>
    %6 = arith.mulf %3, %4 : vector<8x128xf32>
    %c0_3 = arith.constant 0 : index
    %c0_4 = arith.constant 0 : index
    %7 = vector.load %arg3[%c0_3, %c0_4] : memref<128x128xf32, #tpu.memory_space<vmem>>, vector<128x128xf32>
    %cst_5 = arith.constant dense<0.000000e+00> : vector<8x128xf32>
    %8 = tpu.matmul %6, %7, %cst_5 {dimension_numbers = #tpu.dot_dimension_numbers<[1], [0], [0], [1], [0, 0, 1, 1], [], []>} : vector<8x128xf32>, vector<128x128xf32>, vector<8x128xf32> -> vector<8x128xf32>
    %c0_6 = arith.constant 0 : index
    %c0_7 = arith.constant 0 : index
    %9 = vector.load %arg7[%c0_6, %c0_7] : memref<1x128xf32, #tpu.memory_space<vmem>>, vector<1x128xf32>
    %10 = vector.broadcast %9 : vector<1x128xf32> to vector<8x128xf32>
    %11 = arith.addf %8, %10 : vector<8x128xf32>
    %c8_i32 = arith.constant 8 : i32
    %12 = tpu.dynamic_rotate %11 by %c8_i32 dim 1 : vector<8x128xf32>, i32 -> vector<8x128xf32>
    %13 = arith.maximumf %11, %12 : vector<8x128xf32>
    %c120_i32 = arith.constant 120 : i32
    %14 = tpu.dynamic_rotate %11 by %c120_i32 dim 1 : vector<8x128xf32>, i32 -> vector<8x128xf32>
    %15 = arith.maximumf %13, %14 : vector<8x128xf32>
    %c4_i32 = arith.constant 4 : i32
    %16 = tpu.dynamic_rotate %15 by %c4_i32 dim 1 : vector<8x128xf32>, i32 -> vector<8x128xf32>
    %17 = arith.maximumf %15, %16 : vector<8x128xf32>
    %c124_i32 = arith.constant 124 : i32
    %18 = tpu.dynamic_rotate %15 by %c124_i32 dim 1 : vector<8x128xf32>, i32 -> vector<8x128xf32>
    %19 = arith.maximumf %17, %18 : vector<8x128xf32>
    %20 = arith.subf %11, %19 : vector<8x128xf32>
    %21 = math.exp %20 : vector<8x128xf32>
    %c0_8 = arith.constant 0 : index
    %c0_9 = arith.constant 0 : index
    %22 = vector.load %arg4[%c0_8, %c0_9] : memref<128x256xf32, #tpu.memory_space<vmem>>, vector<128x256xf32>
    %cst_10 = arith.constant dense<0.000000e+00> : vector<8x256xf32>
    %23 = tpu.matmul %21, %22, %cst_10 {dimension_numbers = #tpu.dot_dimension_numbers<[1], [0], [0], [1], [0, 0, 1, 1], [], []>} : vector<8x128xf32>, vector<128x256xf32>, vector<8x256xf32> -> vector<8x256xf32>
    %24 = vector.extract_strided_slice %23 {offsets = [0, 0], sizes = [8, 128], strides = [1, 1]} : vector<8x256xf32> to vector<8x128xf32>
    %25 = vector.extract_strided_slice %23 {offsets = [0, 128], sizes = [8, 128], strides = [1, 1]} : vector<8x256xf32> to vector<8x128xf32>
    %26 = tpu.reciprocal %25 : vector<8x128xf32> -> vector<8x128xf32>
    %27 = arith.mulf %24, %26 : vector<8x128xf32>
    %28 = arith.mulf %27, %5 : vector<8x128xf32>
    %c0_11 = arith.constant 0 : index
    %c0_12 = arith.constant 0 : index
    %29 = vector.load %arg5[%c0_11, %c0_12] : memref<128x128xf32, #tpu.memory_space<vmem>>, vector<128x128xf32>
    %cst_13 = arith.constant dense<0.000000e+00> : vector<8x128xf32>
    %30 = tpu.matmul %28, %29, %cst_13 {dimension_numbers = #tpu.dot_dimension_numbers<[1], [0], [0], [1], [0, 0, 1, 1], [], []>} : vector<8x128xf32>, vector<128x128xf32>, vector<8x128xf32> -> vector<8x128xf32>
    %c0_14 = arith.constant 0 : index
    %c0_15 = arith.constant 0 : index
    %31 = vector.load %arg6[%c0_14, %c0_15] : memref<1x128xf32, #tpu.memory_space<vmem>>, vector<1x128xf32>
    %32 = vector.broadcast %31 : vector<1x128xf32> to vector<8x128xf32>
    %33 = arith.addf %30, %32 : vector<8x128xf32>
    %c0_16 = arith.constant 0 : index
    %c0_17 = arith.constant 0 : index
    %34 = vector.load %arg8[%c0_16, %c0_17] : memref<8x128xf32, #tpu.memory_space<vmem>>, vector<8x128xf32>
    tpu.vector_store %arg8[%c0_16, %c0_17], %33 {strides = array<i32>} : memref<8x128xf32, #tpu.memory_space<vmem>>, vector<8x128xf32>,
    return
  }
  func.func @transform_0(%arg0: i32) -> (i32, i32) {
    %c0_i32 = arith.constant 0 : i32
    %c0_i32_0 = arith.constant 0 : i32
    return %arg0, %c0_i32 : i32, i32
  }
  func.func @transform_1(%arg0: i32) -> (i32, i32) {
    %c0_i32 = arith.constant 0 : i32
    %c0_i32_0 = arith.constant 0 : i32
    %c0_i32_1 = arith.constant 0 : i32
    return %c0_i32, %c0_i32_0 : i32, i32
  }
  func.func @transform_2(%arg0: i32) -> (i32, i32) {
    %c0_i32 = arith.constant 0 : i32
    %c0_i32_0 = arith.constant 0 : i32
    %c0_i32_1 = arith.constant 0 : i32
    return %c0_i32, %c0_i32_0 : i32, i32
  }
  func.func @transform_3(%arg0: i32) -> (i32, i32) {
    %c0_i32 = arith.constant 0 : i32
    %c0_i32_0 = arith.constant 0 : i32
    %c0_i32_1 = arith.constant 0 : i32
    return %c0_i32, %c0_i32_0 : i32, i32
  }
  func.func @transform_4(%arg0: i32) -> (i32, i32) {
    %c0_i32 = arith.constant 0 : i32
    %c0_i32_0 = arith.constant 0 : i32
    %c0_i32_1 = arith.constant 0 : i32
    return %c0_i32, %c0_i32_0 : i32, i32
  }
  func.func @transform_5(%arg0: i32) -> (i32, i32) {
    %c0_i32 = arith.constant 0 : i32
    %c0_i32_0 = arith.constant 0 : i32
    %c0_i32_1 = arith.constant 0 : i32
    return %c0_i32, %c0_i32_0 : i32, i32
  }
  func.func @transform_6(%arg0: i32) -> (i32, i32) {
    %c0_i32 = arith.constant 0 : i32
    %c0_i32_0 = arith.constant 0 : i32
    %c0_i32_1 = arith.constant 0 : i32
    return %c0_i32, %c0_i32_0 : i32, i32
  }
  func.func @transform_7(%arg0: i32) -> (i32, i32) {
    %c0_i32 = arith.constant 0 : i32
    %c0_i32_0 = arith.constant 0 : i32
    return %arg0, %c0_i32 : i32, i32
  }
}

</mosaic_0001>

<llo_original>
// kernel: mhsa_forward.1
$region0: #{mhsa_forward.1}
  #allocation0 [shape = 'u32[]', space=smem, size = 0x4, offset = 0x4, fixed_abs, tag = 'smem constant byte address 0x4 - core index']
  #allocation1 [shape = 'u32[144,128]{1,0:T(1,128)}', space=vmem, size = 0x12000, scoped, tag = 'internal scratch']
  %s0 = inlined_call_operand.vmem [shape: f32[8,128], index: 0, kind: input, shape index: {}]
  %s1 = inlined_call_operand.hbm [shape: f32[128,384], index: 1, kind: input, shape index: {}]
  %s2 = inlined_call_operand.hbm [shape: f32[128,128], index: 2, kind: input, shape index: {}]
  %s3 = inlined_call_operand.hbm [shape: f32[128,256], index: 3, kind: input, shape index: {}]
  %s4 = inlined_call_operand.hbm [shape: f32[128,128], index: 4, kind: input, shape index: {}]
  %s5 = inlined_call_operand.vmem [shape: f32[1,128], index: 5, kind: input, shape index: {}]
  %s6 = inlined_call_operand.vmem [shape: f32[1,128], index: 6, kind: input, shape index: {}]
  %s7 = inlined_call_operand.vmem [shape: f32[8,128], index: 7, kind: output, shape index: {}]
  %s8 = sld [smem:[#allocation0]]
  $region54: #{mhsa_forward.1} parent=0
    _
  %s10 = ssub.s32 1, %s8
  %s11 = scalar_select 0, %s10, %s8
  $region1: #{mhsa_forward.1} parent=0
    #allocation2 [shape = 'u8[196608]{0}', space=vmem, size = 0x30000, scoped, tag = 'input window, operand 1, single buffered']
    #allocation3 [shape = 's32[1]{0}', space=sflag, size = 0x4, scoped, tag = 'scoped memory for mhsa_forward.1']
    #allocation4 [shape = 'u8[65536]{0}', space=vmem, size = 0x10000, scoped, tag = 'input window, operand 2, single buffered']
    #allocation5 [shape = 's32[1]{0}', space=sflag, size = 0x4, scoped, tag = 'scoped memory for mhsa_forward.1']
    #allocation6 [shape = 'u8[131072]{0}', space=vmem, size = 0x20000, scoped, tag = 'input window, operand 3, single buffered']
    #allocation7 [shape = 'u8[65536]{0}', space=vmem, size = 0x10000, scoped, tag = 'input window, operand 4, single buffered']
    #allocation8 [shape = 's32[1]{0}', space=sflag, size = 0x4, scoped, tag = 'scoped memory for mhsa_forward.1']
    %12 = vsyncpa [#allocation3], 0
    %13 = vsyncpa [#allocation5], 0
    %14 = vsyncpa [#allocation8], 0
    // Predicated region
    $region2: #{mhsa_forward.1} parent=1 // pred_check
      _
    $region3: #{mhsa_forward.1} parent=1 // pred_check_branch
      %16 = sbr.rel (0) target = $region5
    $region4: #{mhsa_forward.1} parent=1 // pred_region
      _
    $region5: #{mhsa_forward.1} parent=1 // pred_fallthru
      _
    // Predicated region
    $region6: #{mhsa_forward.1} parent=1 // pred_check
      _
    $region7: #{mhsa_forward.1} parent=1 // pred_check_branch
      %18 = sbr.rel (0) target = $region9
    $region8: #{mhsa_forward.1} parent=1 // pred_region
      %s20 = ssub.s32 6144, 6144
      %21 = vsyncadd [#allocation3], %s20
      %s22 = sshll.u32 [#allocation2], 4
      %s23 = int_to_ptr.vmem [resolvable:$true] %s22
      %28 = dma.hbm_to_vmem [thread:$0]  %s1, 6144, %s23, [#allocation3], 384, 384, 24
    $region9: #{mhsa_forward.1} parent=1 // pred_fallthru
      _
    // Predicated region
    $region10: #{mhsa_forward.1} parent=1 // pred_check
      _
    $region11: #{mhsa_forward.1} parent=1 // pred_check_branch
      %30 = sbr.rel (0) target = $region13
    $region12: #{mhsa_forward.1} parent=1 // pred_region
      %s32 = ssub.s32 2048, 2048
      %33 = vsyncadd [#allocation5], %s32
      %s34 = sshll.u32 [#allocation4], 4
      %s35 = int_to_ptr.vmem [resolvable:$true] %s34
      %40 = dma.hbm_to_vmem [thread:$0]  %s2, 2048, %s35, [#allocation5], 128, 128, 8
    $region13: #{mhsa_forward.1} parent=1 // pred_fallthru
      _
    // Predicated region
    $region14: #{mhsa_forward.1} parent=1 // pred_check
      _
    $region15: #{mhsa_forward.1} parent=1 // pred_check_branch
      %42 = sbr.rel (0) target = $region17
    $region16: #{mhsa_forward.1} parent=1 // pred_region
      %s44 = ssub.s32 4096, 4096
      %45 = vsyncadd [#allocation5], %s44
      %s46 = sshll.u32 [#allocation6], 4
      %s47 = int_to_ptr.vmem [resolvable:$true] %s46
      %52 = dma.hbm_to_vmem [thread:$0]  %s3, 4096, %s47, [#allocation5], 256, 256, 16
    $region17: #{mhsa_forward.1} parent=1 // pred_fallthru
      _
    // Predicated region
    $region18: #{mhsa_forward.1} parent=1 // pred_check
      _
    $region19: #{mhsa_forward.1} parent=1 // pred_check_branch
      %54 = sbr.rel (0) target = $region21
    $region20: #{mhsa_forward.1} parent=1 // pred_region
      %s56 = ssub.s32 2048, 2048
      %57 = vsyncadd [#allocation8], %s56
      %s58 = sshll.u32 [#allocation7], 4
      %s59 = int_to_ptr.vmem [resolvable:$true] %s58
      %64 = dma.hbm_to_vmem [thread:$0]  %s4, 2048, %s59, [#allocation8], 128, 128, 8
    $region21: #{mhsa_forward.1} parent=1 // pred_fallthru
      _
    // Predicated region
    $region22: #{mhsa_forward.1} parent=1 // pred_check
      _
    $region23: #{mhsa_forward.1} parent=1 // pred_check_branch
      %66 = sbr.rel (0) target = $region25
    $region24: #{mhsa_forward.1} parent=1 // pred_region
      _
    $region25: #{mhsa_forward.1} parent=1 // pred_fallthru
      _
    // Predicated region
    $region26: #{mhsa_forward.1} parent=1 // pred_check
      _
    $region27: #{mhsa_forward.1} parent=1 // pred_check_branch
      %68 = sbr.rel (0) target = $region29
    $region28: #{mhsa_forward.1} parent=1 // pred_region
      _
    $region29: #{mhsa_forward.1} parent=1 // pred_fallthru
      _
    // Predicated region
    $region30: #{mhsa_forward.1} parent=1 // pred_check
      _
    $region31: #{mhsa_forward.1} parent=1 // pred_check_branch
      %70 = sbr.rel (0) target = $region33
    $region32: #{mhsa_forward.1} parent=1 // pred_region
      %71 = dma.done [#allocation3], 6144
    $region33: #{mhsa_forward.1} parent=1 // pred_fallthru
      _
    // Predicated region
    $region34: #{mhsa_forward.1} parent=1 // pred_check
      _
    $region35: #{mhsa_forward.1} parent=1 // pred_check_branch
      %73 = sbr.rel (0) target = $region37
    $region36: #{mhsa_forward.1} parent=1 // pred_region
      %74 = dma.done [#allocation5], 2048
    $region37: #{mhsa_forward.1} parent=1 // pred_fallthru
      _
    // Predicated region
    $region38: #{mhsa_forward.1} parent=1 // pred_check
      _
    $region39: #{mhsa_forward.1} parent=1 // pred_check_branch
      %76 = sbr.rel (0) target = $region41
    $region40: #{mhsa_forward.1} parent=1 // pred_region
      %77 = dma.done [#allocation5], 4096
    $region41: #{mhsa_forward.1} parent=1 // pred_fallthru
      _
    // Predicated region
    $region42: #{mhsa_forward.1} parent=1 // pred_check
      _
    $region43: #{mhsa_forward.1} parent=1 // pred_check_branch
      %79 = sbr.rel (0) target = $region45
    $region44: #{mhsa_forward.1} parent=1 // pred_region
      %80 = dma.done [#allocation8], 2048
    $region45: #{mhsa_forward.1} parent=1 // pred_fallthru
      _
    %v81 = vld [vmem:[%s0] sm:$0xff]
    %v82 = vld [vmem:[#allocation2] sm:$0xff]
    %v83 = vld [vmem:[#allocation2 + $0x8] sm:$0xff]
    %v84 = vld [vmem:[#allocation2 + $0x10] sm:$0xff]
    %v85 = vld [vmem:[#allocation2 + $0x18] sm:$0xff]
    %v86 = vld [vmem:[#allocation2 + $0x20] sm:$0xff]
    %v87 = vld [vmem:[#allocation2 + $0x28] sm:$0xff]
    %v88 = vld [vmem:[#allocation2 + $0x30] sm:$0xff]
    %v89 = vld [vmem:[#allocation2 + $0x38] sm:$0xff]
    %v90 = vld [vmem:[#allocation2 + $0x40] sm:$0xff]
    %v91 = vld [vmem:[#allocation2 + $0x48] sm:$0xff]
    %v92 = vld [vmem:[#allocation2 + $0x50] sm:$0xff]
    %v93 = vld [vmem:[#allocation2 + $0x58] sm:$0xff]
    %v94 = vld [vmem:[#allocation2 + $0x60] sm:$0xff]
    %v95 = vld [vmem:[#allocation2 + $0x68] sm:$0xff]
    %v96 = vld [vmem:[#allocation2 + $0x70] sm:$0xff]
    %v97 = vld [vmem:[#allocation2 + $0x78] sm:$0xff]
    %v98 = vld [vmem:[#allocation2 + $0x80] sm:$0xff]
    %v99 = vld [vmem:[#allocation2 + $0x88] sm:$0xff]
    %v100 = vld [vmem:[#allocation2 + $0x90] sm:$0xff]
    %v101 = vld [vmem:[#allocation2 + $0x98] sm:$0xff]
    %v102 = vld [vmem:[#allocation2 + $0xa0] sm:$0xff]
    %v103 = vld [vmem:[#allocation2 + $0xa8] sm:$0xff]
    %v104 = vld [vmem:[#allocation2 + $0xb0] sm:$0xff]
    %v105 = vld [vmem:[#allocation2 + $0xb8] sm:$0xff]
    %v106 = vld [vmem:[#allocation2 + $0xc0] sm:$0xff]
    %v107 = vld [vmem:[#allocation2 + $0xc8] sm:$0xff]
    %v108 = vld [vmem:[#allocation2 + $0xd0] sm:$0xff]
    %v109 = vld [vmem:[#allocation2 + $0xd8] sm:$0xff]
    %v110 = vld [vmem:[#allocation2 + $0xe0] sm:$0xff]
    %v111 = vld [vmem:[#allocation2 + $0xe8] sm:$0xff]
    %v112 = vld [vmem:[#allocation2 + $0xf0] sm:$0xff]
    %v113 = vld [vmem:[#allocation2 + $0xf8] sm:$0xff]
    %v114 = vld [vmem:[#allocation2 + $0x100] sm:$0xff]
    %v115 = vld [vmem:[#allocation2 + $0x108] sm:$0xff]
    %v116 = vld [vmem:[#allocation2 + $0x110] sm:$0xff]
    %v117 = vld [vmem:[#allocation2 + $0x118] sm:$0xff]
    %v118 = vld [vmem:[#allocation2 + $0x120] sm:$0xff]
    %v119 = vld [vmem:[#allocation2 + $0x128] sm:$0xff]
    %v120 = vld [vmem:[#allocation2 + $0x130] sm:$0xff]
    %v121 = vld [vmem:[#allocation2 + $0x138] sm:$0xff]
    %v122 = vld [vmem:[#allocation2 + $0x140] sm:$0xff]
    %v123 = vld [vmem:[#allocation2 + $0x148] sm:$0xff]
    %v124 = vld [vmem:[#allocation2 + $0x150] sm:$0xff]
    %v125 = vld [vmem:[#allocation2 + $0x158] sm:$0xff]
    %v126 = vld [vmem:[#allocation2 + $0x160] sm:$0xff]
    %v127 = vld [vmem:[#allocation2 + $0x168] sm:$0xff]
    %v128 = vld [vmem:[#allocation2 + $0x170] sm:$0xff]
    %v129 = vld [vmem:[#allocation2 + $0x178] sm:$0xff]
    %130 = vmatprep.subr.mxu0 %v128
    %131 = vmatpush1.msra.mxu0 %v127
    %132 = vmatprep.subr.mxu0 %v125
    %133 = vmatpush1.msra.mxu0 %v124
    %134 = vmatprep.subr.mxu0 %v122
    %135 = vmatpush1.msra.mxu0 %v121
    %136 = vmatprep.subr.mxu0 %v119
    %137 = vmatpush1.msra.mxu0 %v118
    %138 = vmatprep.subr.mxu0 %v116
    %139 = vmatpush1.msra.mxu0 %v115
    %140 = vmatprep.subr.mxu0 %v113
    %141 = vmatpush1.msra.mxu0 %v112
    %142 = vmatprep.subr.mxu0 %v110
    %143 = vmatpush1.msra.mxu0 %v109
    %144 = vmatprep.subr.mxu0 %v107
    %145 = vmatpush1.msra.mxu0 %v106
    %146 = vmatprep.subr.mxu0 %v104
    %147 = vmatpush1.msra.mxu0 %v103
    %148 = vmatprep.subr.mxu0 %v101
    %149 = vmatpush1.msra.mxu0 %v100
    %150 = vmatprep.subr.mxu0 %v98
    %151 = vmatpush1.msra.mxu0 %v97
    %152 = vmatprep.subr.mxu0 %v95
    %153 = vmatpush1.msra.mxu0 %v94
    %154 = vmatprep.subr.mxu0 %v92
    %155 = vmatpush1.msra.mxu0 %v91
    %156 = vmatprep.subr.mxu0 %v89
    %157 = vmatpush1.msra.mxu0 %v88
    %158 = vmatprep.subr.mxu0 %v86
    %159 = vmatpush1.msra.mxu0 %v85
    %160 = vmatprep.subr.mxu0 %v83
    %161 = vmatpush1.msra.mxu0 %v82
    %162 = vmatprep.subr.mxu0 0.0
    %163 = vmatpush2.msra.mxu0 0.0
    %164 = vmatprep.subr.mxu0 0.0
    %165 = vmatpush2.msra.mxu0 0.0
    %166 = vmatprep.subr.mxu0 0.0
    %167 = vmatpush2.msra.mxu0 0.0
    %168 = vmatprep.subr.mxu0 0.0
    %169 = vmatpush2.msra.mxu0 0.0
    %170 = vmatprep.subr.mxu0 0.0
    %171 = vmatpush2.msra.mxu0 0.0
    %172 = vmatprep.subr.mxu0 0.0
    %173 = vmatpush2.msra.mxu0 0.0
    %174 = vmatprep.subr.mxu0 0.0
    %175 = vmatpush2.msra.mxu0 0.0
    %176 = vmatprep.subr.mxu0 0.0
    %177 = vmatpush2.msra.mxu0 0.0
    %178 = vmatprep.subr.mxu0 0.0
    %179 = vmatpush2.msra.mxu0 0.0
    %180 = vmatprep.subr.mxu0 0.0
    %181 = vmatpush2.msra.mxu0 0.0
    %182 = vmatprep.subr.mxu0 0.0
    %183 = vmatpush2.msra.mxu0 0.0
    %184 = vmatprep.subr.mxu0 0.0
    %185 = vmatpush2.msra.mxu0 0.0
    %186 = vmatprep.subr.mxu0 0.0
    %187 = vmatpush2.msra.mxu0 0.0
    %188 = vmatprep.subr.mxu0 0.0
    %189 = vmatpush2.msra.mxu0 0.0
    %190 = vmatprep.subr.mxu0 0.0
    %191 = vmatpush2.msra.mxu0 0.0
    %192 = vmatprep.subr.mxu0 0.0
    %193 = vmatpush2.msra.mxu0 0.0
    %194 = vmatprep.mubr.f32.mxu0 0.0
    %195 = vmatmul.mubr.f32.gmra.mxu0 %v81
    %v196 = vpop.f32.mrf.mxu0
    %v197 = vadd.f32 0.0, %v196
    %v198 = vpop.f32.mrf.mxu0
    %v199 = vadd.f32 0.0, %v198
    %200 = vdwg.mxu0
    %201 = vmatprep.subr.mxu0 0.0
    %202 = vmatpush1.msra.mxu0 %v129
    %203 = vmatprep.subr.mxu0 0.0
    %204 = vmatpush1.msra.mxu0 %v126
    %205 = vmatprep.subr.mxu0 0.0
    %206 = vmatpush1.msra.mxu0 %v123
    %207 = vmatprep.subr.mxu0 0.0
    %208 = vmatpush1.msra.mxu0 %v120
    %209 = vmatprep.subr.mxu0 0.0
    %210 = vmatpush1.msra.mxu0 %v117
    %211 = vmatprep.subr.mxu0 0.0
    %212 = vmatpush1.msra.mxu0 %v114
    %213 = vmatprep.subr.mxu0 0.0
    %214 = vmatpush1.msra.mxu0 %v111
    %215 = vmatprep.subr.mxu0 0.0
    %216 = vmatpush1.msra.mxu0 %v108
    %217 = vmatprep.subr.mxu0 0.0
    %218 = vmatpush1.msra.mxu0 %v105
    %219 = vmatprep.subr.mxu0 0.0
    %220 = vmatpush1.msra.mxu0 %v102
    %221 = vmatprep.subr.mxu0 0.0
    %222 = vmatpush1.msra.mxu0 %v99
    %223 = vmatprep.subr.mxu0 0.0
    %224 = vmatpush1.msra.mxu0 %v96
    %225 = vmatprep.subr.mxu0 0.0
    %226 = vmatpush1.msra.mxu0 %v93
    %227 = vmatprep.subr.mxu0 0.0
    %228 = vmatpush1.msra.mxu0 %v90
    %229 = vmatprep.subr.mxu0 0.0
    %230 = vmatpush1.msra.mxu0 %v87
    %231 = vmatprep.subr.mxu0 0.0
    %232 = vmatpush1.msra.mxu0 %v84
    %233 = vmatprep.subr.mxu0 0.0
    %234 = vmatpush2.msra.mxu0 0.0
    %235 = vmatprep.subr.mxu0 0.0
    %236 = vmatpush2.msra.mxu0 0.0
    %237 = vmatprep.subr.mxu0 0.0
    %238 = vmatpush2.msra.mxu0 0.0
    %239 = vmatprep.subr.mxu0 0.0
    %240 = vmatpush2.msra.mxu0 0.0
    %241 = vmatprep.subr.mxu0 0.0
    %242 = vmatpush2.msra.mxu0 0.0
    %243 = vmatprep.subr.mxu0 0.0
    %244 = vmatpush2.msra.mxu0 0.0
    %245 = vmatprep.subr.mxu0 0.0
    %246 = vmatpush2.msra.mxu0 0.0
    %247 = vmatprep.subr.mxu0 0.0
    %248 = vmatpush2.msra.mxu0 0.0
    %249 = vmatprep.subr.mxu0 0.0
    %250 = vmatpush2.msra.mxu0 0.0
    %251 = vmatprep.subr.mxu0 0.0
    %252 = vmatpush2.msra.mxu0 0.0
    %253 = vmatprep.subr.mxu0 0.0
    %254 = vmatpush2.msra.mxu0 0.0
    %255 = vmatprep.subr.mxu0 0.0
    %256 = vmatpush2.msra.mxu0 0.0
    %257 = vmatprep.subr.mxu0 0.0
    %258 = vmatpush2.msra.mxu0 0.0
    %259 = vmatprep.subr.mxu0 0.0
    %260 = vmatpush2.msra.mxu0 0.0
    %261 = vmatprep.subr.mxu0 0.0
    %262 = vmatpush2.msra.mxu0 0.0
    %263 = vmatprep.subr.mxu0 0.0
    %264 = vmatpush2.msra.mxu0 0.0
    %265 = vmatprep.mubr.f32.mxu0 0.0
    %266 = vmatmul.mubr.f32.gmra.mxu0 %v81
    %v267 = vpop.f32.mrf.mxu0
    %v268 = vadd.f32 0.0, %v267
    %v269 = vpop.f32.mrf.mxu0
    %270 = vdwg.mxu0
    %v271 = vmul.f32 %v197, %v199
    %v272 = vld [vmem:[#allocation4] sm:$0xff]
    %v273 = vld [vmem:[#allocation4 + $0x8] sm:$0xff]
    %v274 = vld [vmem:[#allocation4 + $0x10] sm:$0xff]
    %v275 = vld [vmem:[#allocation4 + $0x18] sm:$0xff]
    %v276 = vld [vmem:[#allocation4 + $0x20] sm:$0xff]
    %v277 = vld [vmem:[#allocation4 + $0x28] sm:$0xff]
    %v278 = vld [vmem:[#allocation4 + $0x30] sm:$0xff]
    %v279 = vld [vmem:[#allocation4 + $0x38] sm:$0xff]
    %v280 = vld [vmem:[#allocation4 + $0x40] sm:$0xff]
    %v281 = vld [vmem:[#allocation4 + $0x48] sm:$0xff]
    %v282 = vld [vmem:[#allocation4 + $0x50] sm:$0xff]
    %v283 = vld [vmem:[#allocation4 + $0x58] sm:$0xff]
    %v284 = vld [vmem:[#allocation4 + $0x60] sm:$0xff]
    %v285 = vld [vmem:[#allocation4 + $0x68] sm:$0xff]
    %v286 = vld [vmem:[#allocation4 + $0x70] sm:$0xff]
    %v287 = vld [vmem:[#allocation4 + $0x78] sm:$0xff]
    %v288 = vld [vmem:[%s6] sm:$0x1]
    %v290 = vlaneseq
    %v291 = vshrl.u32 %v290, 7
    %v292 = vsub.s32 0, %v291
    %v293 = vrot.slane %v288, %v292
    %295 = vmatprep.subr.mxu0 0.0
    %296 = vmatpush1.msra.mxu0 %v287
    %297 = vmatprep.subr.mxu0 0.0
    %298 = vmatpush1.msra.mxu0 %v286
    %299 = vmatprep.subr.mxu0 0.0
    %300 = vmatpush1.msra.mxu0 %v285
    %301 = vmatprep.subr.mxu0 0.0
    %302 = vmatpush1.msra.mxu0 %v284
    %303 = vmatprep.subr.mxu0 0.0
    %304 = vmatpush1.msra.mxu0 %v283
    %305 = vmatprep.subr.mxu0 0.0
    %306 = vmatpush1.msra.mxu0 %v282
    %307 = vmatprep.subr.mxu0 0.0
    %308 = vmatpush1.msra.mxu0 %v281
    %309 = vmatprep.subr.mxu0 0.0
    %310 = vmatpush1.msra.mxu0 %v280
    %311 = vmatprep.subr.mxu0 0.0
    %312 = vmatpush1.msra.mxu0 %v279
    %313 = vmatprep.subr.mxu0 0.0
    %314 = vmatpush1.msra.mxu0 %v278
    %315 = vmatprep.subr.mxu0 0.0
    %316 = vmatpush1.msra.mxu0 %v277
    %317 = vmatprep.subr.mxu0 0.0
    %318 = vmatpush1.msra.mxu0 %v276
    %319 = vmatprep.subr.mxu0 0.0
    %320 = vmatpush1.msra.mxu0 %v275
    %321 = vmatprep.subr.mxu0 0.0
    %322 = vmatpush1.msra.mxu0 %v274
    %323 = vmatprep.subr.mxu0 0.0
    %324 = vmatpush1.msra.mxu0 %v273
    %325 = vmatprep.subr.mxu0 0.0
    %326 = vmatpush1.msra.mxu0 %v272
    %327 = vmatprep.subr.mxu0 0.0
    %328 = vmatpush2.msra.mxu0 0.0
    %329 = vmatprep.subr.mxu0 0.0
    %330 = vmatpush2.msra.mxu0 0.0
    %331 = vmatprep.subr.mxu0 0.0
    %332 = vmatpush2.msra.mxu0 0.0
    %333 = vmatprep.subr.mxu0 0.0
    %334 = vmatpush2.msra.mxu0 0.0
    %335 = vmatprep.subr.mxu0 0.0
    %336 = vmatpush2.msra.mxu0 0.0
    %337 = vmatprep.subr.mxu0 0.0
    %338 = vmatpush2.msra.mxu0 0.0
    %339 = vmatprep.subr.mxu0 0.0
    %340 = vmatpush2.msra.mxu0 0.0
    %341 = vmatprep.subr.mxu0 0.0
    %342 = vmatpush2.msra.mxu0 0.0
    %343 = vmatprep.subr.mxu0 0.0
    %344 = vmatpush2.msra.mxu0 0.0
    %345 = vmatprep.subr.mxu0 0.0
    %346 = vmatpush2.msra.mxu0 0.0
    %347 = vmatprep.subr.mxu0 0.0
    %348 = vmatpush2.msra.mxu0 0.0
    %349 = vmatprep.subr.mxu0 0.0
    %350 = vmatpush2.msra.mxu0 0.0
    %351 = vmatprep.subr.mxu0 0.0
    %352 = vmatpush2.msra.mxu0 0.0
    %353 = vmatprep.subr.mxu0 0.0
    %354 = vmatpush2.msra.mxu0 0.0
    %355 = vmatprep.subr.mxu0 0.0
    %356 = vmatpush2.msra.mxu0 0.0
    %357 = vmatprep.subr.mxu0 0.0
    %358 = vmatpush2.msra.mxu0 0.0
    %359 = vmatprep.mubr.f32.mxu0 0.0
    %360 = vmatmul.mubr.f32.gmra.mxu0 %v271
    %v361 = vpop.f32.mrf.mxu0
    %v362 = vadd.f32 %v293, %v361
    %v363 = vpop.f32.mrf.mxu0
    %364 = vdwg.mxu0
    %365 = vrot.lane.b32.xlu0 %v362, 8
    %v366 = vpop.permute.xlu0 %365
    %v367 = vmax.f32 %v362, %v366
    %368 = vrot.lane.b32.xlu0 %v362, 120
    %v369 = vpop.permute.xlu0 %368
    %v370 = vmax.f32 %v367, %v369
    %371 = vrot.lane.b32.xlu0 %v370, 4
    %v372 = vpop.permute.xlu0 %371
    %v373 = vmax.f32 %v370, %v372
    %374 = vrot.lane.b32.xlu0 %v370, 124
    %v375 = vpop.permute.xlu0 %374
    %v376 = vmax.f32 %v373, %v375
    %v377 = vsub.f32 %v362, %v376
    %v378 = vmul.f32 %v377, 1.442695
    %v379 = vpow.pop %v378
    %v380 = vld [vmem:[#allocation6] sm:$0xff]
    %v381 = vld [vmem:[#allocation6 + $0x8] sm:$0xff]
    %v382 = vld [vmem:[#allocation6 + $0x10] sm:$0xff]
    %v383 = vld [vmem:[#allocation6 + $0x18] sm:$0xff]
    %v384 = vld [vmem:[#allocation6 + $0x20] sm:$0xff]
    %v385 = vld [vmem:[#allocation6 + $0x28] sm:$0xff]
    %v386 = vld [vmem:[#allocation6 + $0x30] sm:$0xff]
    %v387 = vld [vmem:[#allocation6 + $0x38] sm:$0xff]
    %v388 = vld [vmem:[#allocation6 + $0x40] sm:$0xff]
    %v389 = vld [vmem:[#allocation6 + $0x48] sm:$0xff]
    %v390 = vld [vmem:[#allocation6 + $0x50] sm:$0xff]
    %v391 = vld [vmem:[#allocation6 + $0x58] sm:$0xff]
    %v392 = vld [vmem:[#allocation6 + $0x60] sm:$0xff]
    %v393 = vld [vmem:[#allocation6 + $0x68] sm:$0xff]
    %v394 = vld [vmem:[#allocation6 + $0x70] sm:$0xff]
    %v395 = vld [vmem:[#allocation6 + $0x78] sm:$0xff]
    %v396 = vld [vmem:[#allocation6 + $0x80] sm:$0xff]
    %v397 = vld [vmem:[#allocation6 + $0x88] sm:$0xff]
    %v398 = vld [vmem:[#allocation6 + $0x90] sm:$0xff]
    %v399 = vld [vmem:[#allocation6 + $0x98] sm:$0xff]
    %v400 = vld [vmem:[#allocation6 + $0xa0] sm:$0xff]
    %v401 = vld [vmem:[#allocation6 + $0xa8] sm:$0xff]
    %v402 = vld [vmem:[#allocation6 + $0xb0] sm:$0xff]
    %v403 = vld [vmem:[#allocation6 + $0xb8] sm:$0xff]
    %v404 = vld [vmem:[#allocation6 + $0xc0] sm:$0xff]
    %v405 = vld [vmem:[#allocation6 + $0xc8] sm:$0xff]
    %v406 = vld [vmem:[#allocation6 + $0xd0] sm:$0xff]
    %v407 = vld [vmem:[#allocation6 + $0xd8] sm:$0xff]
    %v408 = vld [vmem:[#allocation6 + $0xe0] sm:$0xff]
    %v409 = vld [vmem:[#allocation6 + $0xe8] sm:$0xff]
    %v410 = vld [vmem:[#allocation6 + $0xf0] sm:$0xff]
    %v411 = vld [vmem:[#allocation6 + $0xf8] sm:$0xff]
    %412 = vmatprep.subr.mxu0 %v411
    %413 = vmatpush1.msra.mxu0 %v410
    %414 = vmatprep.subr.mxu0 %v409
    %415 = vmatpush1.msra.mxu0 %v408
    %416 = vmatprep.subr.mxu0 %v407
    %417 = vmatpush1.msra.mxu0 %v406
    %418 = vmatprep.subr.mxu0 %v405
    %419 = vmatpush1.msra.mxu0 %v404
    %420 = vmatprep.subr.mxu0 %v403
    %421 = vmatpush1.msra.mxu0 %v402
    %422 = vmatprep.subr.mxu0 %v401
    %423 = vmatpush1.msra.mxu0 %v400
    %424 = vmatprep.subr.mxu0 %v399
    %425 = vmatpush1.msra.mxu0 %v398
    %426 = vmatprep.subr.mxu0 %v397
    %427 = vmatpush1.msra.mxu0 %v396
    %428 = vmatprep.subr.mxu0 %v395
    %429 = vmatpush1.msra.mxu0 %v394
    %430 = vmatprep.subr.mxu0 %v393
    %431 = vmatpush1.msra.mxu0 %v392
    %432 = vmatprep.subr.mxu0 %v391
    %433 = vmatpush1.msra.mxu0 %v390
    %434 = vmatprep.subr.mxu0 %v389
    %435 = vmatpush1.msra.mxu0 %v388
    %436 = vmatprep.subr.mxu0 %v387
    %437 = vmatpush1.msra.mxu0 %v386
    %438 = vmatprep.subr.mxu0 %v385
    %439 = vmatpush1.msra.mxu0 %v384
    %440 = vmatprep.subr.mxu0 %v383
    %441 = vmatpush1.msra.mxu0 %v382
    %442 = vmatprep.subr.mxu0 %v381
    %443 = vmatpush1.msra.mxu0 %v380
    %444 = vmatprep.subr.mxu0 0.0
    %445 = vmatpush2.msra.mxu0 0.0
    %446 = vmatprep.subr.mxu0 0.0
    %447 = vmatpush2.msra.mxu0 0.0
    %448 = vmatprep.subr.mxu0 0.0
    %449 = vmatpush2.msra.mxu0 0.0
    %450 = vmatprep.subr.mxu0 0.0
    %451 = vmatpush2.msra.mxu0 0.0
    %452 = vmatprep.subr.mxu0 0.0
    %453 = vmatpush2.msra.mxu0 0.0
    %454 = vmatprep.subr.mxu0 0.0
    %455 = vmatpush2.msra.mxu0 0.0
    %456 = vmatprep.subr.mxu0 0.0
    %457 = vmatpush2.msra.mxu0 0.0
    %458 = vmatprep.subr.mxu0 0.0
    %459 = vmatpush2.msra.mxu0 0.0
    %460 = vmatprep.subr.mxu0 0.0
    %461 = vmatpush2.msra.mxu0 0.0
    %462 = vmatprep.subr.mxu0 0.0
    %463 = vmatpush2.msra.mxu0 0.0
    %464 = vmatprep.subr.mxu0 0.0
    %465 = vmatpush2.msra.mxu0 0.0
    %466 = vmatprep.subr.mxu0 0.0
    %467 = vmatpush2.msra.mxu0 0.0
    %468 = vmatprep.subr.mxu0 0.0
    %469 = vmatpush2.msra.mxu0 0.0
    %470 = vmatprep.subr.mxu0 0.0
    %471 = vmatpush2.msra.mxu0 0.0
    %472 = vmatprep.subr.mxu0 0.0
    %473 = vmatpush2.msra.mxu0 0.0
    %474 = vmatprep.subr.mxu0 0.0
    %475 = vmatpush2.msra.mxu0 0.0
    %476 = vmatprep.mubr.f32.mxu0 0.0
    %477 = vmatmul.mubr.f32.gmra.mxu0 %v379
    %v478 = vpop.f32.mrf.mxu0
    %v479 = vadd.f32 0.0, %v478
    %v480 = vpop.f32.mrf.mxu0
    %v481 = vadd.f32 0.0, %v480
    %482 = vdwg.mxu0
    %v483 = vrcp.pop %v481
    %v484 = vmul.f32 %v479, %v483
    %v485 = vmul.f32 %v484, %v268
    %v486 = vld [vmem:[#allocation7] sm:$0xff]
    %v487 = vld [vmem:[#allocation7 + $0x8] sm:$0xff]
    %v488 = vld [vmem:[#allocation7 + $0x10] sm:$0xff]
    %v489 = vld [vmem:[#allocation7 + $0x18] sm:$0xff]
    %v490 = vld [vmem:[#allocation7 + $0x20] sm:$0xff]
    %v491 = vld [vmem:[#allocation7 + $0x28] sm:$0xff]
    %v492 = vld [vmem:[#allocation7 + $0x30] sm:$0xff]
    %v493 = vld [vmem:[#allocation7 + $0x38] sm:$0xff]
    %v494 = vld [vmem:[#allocation7 + $0x40] sm:$0xff]
    %v495 = vld [vmem:[#allocation7 + $0x48] sm:$0xff]
    %v496 = vld [vmem:[#allocation7 + $0x50] sm:$0xff]
    %v497 = vld [vmem:[#allocation7 + $0x58] sm:$0xff]
    %v498 = vld [vmem:[#allocation7 + $0x60] sm:$0xff]
    %v499 = vld [vmem:[#allocation7 + $0x68] sm:$0xff]
    %v500 = vld [vmem:[#allocation7 + $0x70] sm:$0xff]
    %v501 = vld [vmem:[#allocation7 + $0x78] sm:$0xff]
    %v502 = vld [vmem:[%s5] sm:$0x1]
    %v504 = vlaneseq
    %v505 = vshrl.u32 %v504, 7
    %v506 = vsub.s32 0, %v505
    %v507 = vrot.slane %v502, %v506
    %509 = vmatprep.subr.mxu0 0.0
    %510 = vmatpush1.msra.mxu0 %v501
    %511 = vmatprep.subr.mxu0 0.0
    %512 = vmatpush1.msra.mxu0 %v500
    %513 = vmatprep.subr.mxu0 0.0
    %514 = vmatpush1.msra.mxu0 %v499
    %515 = vmatprep.subr.mxu0 0.0
    %516 = vmatpush1.msra.mxu0 %v498
    %517 = vmatprep.subr.mxu0 0.0
    %518 = vmatpush1.msra.mxu0 %v497
    %519 = vmatprep.subr.mxu0 0.0
    %520 = vmatpush1.msra.mxu0 %v496
    %521 = vmatprep.subr.mxu0 0.0
    %522 = vmatpush1.msra.mxu0 %v495
    %523 = vmatprep.subr.mxu0 0.0
    %524 = vmatpush1.msra.mxu0 %v494
    %525 = vmatprep.subr.mxu0 0.0
    %526 = vmatpush1.msra.mxu0 %v493
    %527 = vmatprep.subr.mxu0 0.0
    %528 = vmatpush1.msra.mxu0 %v492
    %529 = vmatprep.subr.mxu0 0.0
    %530 = vmatpush1.msra.mxu0 %v491
    %531 = vmatprep.subr.mxu0 0.0
    %532 = vmatpush1.msra.mxu0 %v490
    %533 = vmatprep.subr.mxu0 0.0
    %534 = vmatpush1.msra.mxu0 %v489
    %535 = vmatprep.subr.mxu0 0.0
    %536 = vmatpush1.msra.mxu0 %v488
    %537 = vmatprep.subr.mxu0 0.0
    %538 = vmatpush1.msra.mxu0 %v487
    %539 = vmatprep.subr.mxu0 0.0
    %540 = vmatpush1.msra.mxu0 %v486
    %541 = vmatprep.subr.mxu0 0.0
    %542 = vmatpush2.msra.mxu0 0.0
    %543 = vmatprep.subr.mxu0 0.0
    %544 = vmatpush2.msra.mxu0 0.0
    %545 = vmatprep.subr.mxu0 0.0
    %546 = vmatpush2.msra.mxu0 0.0
    %547 = vmatprep.subr.mxu0 0.0
    %548 = vmatpush2.msra.mxu0 0.0
    %549 = vmatprep.subr.mxu0 0.0
    %550 = vmatpush2.msra.mxu0 0.0
    %551 = vmatprep.subr.mxu0 0.0
    %552 = vmatpush2.msra.mxu0 0.0
    %553 = vmatprep.subr.mxu0 0.0
    %554 = vmatpush2.msra.mxu0 0.0
    %555 = vmatprep.subr.mxu0 0.0
    %556 = vmatpush2.msra.mxu0 0.0
    %557 = vmatprep.subr.mxu0 0.0
    %558 = vmatpush2.msra.mxu0 0.0
    %559 = vmatprep.subr.mxu0 0.0
    %560 = vmatpush2.msra.mxu0 0.0
    %561 = vmatprep.subr.mxu0 0.0
    %562 = vmatpush2.msra.mxu0 0.0
    %563 = vmatprep.subr.mxu0 0.0
    %564 = vmatpush2.msra.mxu0 0.0
    %565 = vmatprep.subr.mxu0 0.0
    %566 = vmatpush2.msra.mxu0 0.0
    %567 = vmatprep.subr.mxu0 0.0
    %568 = vmatpush2.msra.mxu0 0.0
    %569 = vmatprep.subr.mxu0 0.0
    %570 = vmatpush2.msra.mxu0 0.0
    %571 = vmatprep.subr.mxu0 0.0
    %572 = vmatpush2.msra.mxu0 0.0
    %573 = vmatprep.mubr.f32.mxu0 0.0
    %574 = vmatmul.mubr.f32.gmra.mxu0 %v485
    %v575 = vpop.f32.mrf.mxu0
    %v576 = vadd.f32 %v507, %v575
    %v577 = vpop.f32.mrf.mxu0
    %578 = vdwg.mxu0
    %579 = vst [vmem:[%s7] sm:$0xff] %v576
    // Predicated region
    $region46: #{mhsa_forward.1} parent=1 // pred_check
      _
    $region47: #{mhsa_forward.1} parent=1 // pred_check_branch
      %581 = sbr.rel (0) target = $region49
    $region48: #{mhsa_forward.1} parent=1 // pred_region
      _
    $region49: #{mhsa_forward.1} parent=1 // pred_fallthru
      _
    // Predicated region
    $region50: #{mhsa_forward.1} parent=1 // pred_check
      _
    $region51: #{mhsa_forward.1} parent=1 // pred_check_branch
      %583 = sbr.rel (0) target = $region53
    $region52: #{mhsa_forward.1} parent=1 // pred_region
      _
    $region53: #{mhsa_forward.1} parent=1 // pred_fallthru
      _
    %584 = vsyncpa [#allocation3], 1
    %585 = vsyncpa [#allocation5], 1
    %586 = vsyncpa [#allocation8], 1

</llo_original>
